<compile_context>
chip_gen: v7x
topology: tpu7x:2x2x1
jax: 0.10.0
libtpu: 0.0.40
codegen_flags: <defaults>
</compile_context>

<pallas_src>
import jax
import jax.numpy as jnp
from jax.experimental import pallas as pl
from jax.experimental.pallas import tpu as pltpu

_LANE = 128
_SUBLANE = 8


def _round_up(v, m):
    return ((v + m - 1) // m) * m


# --------------------------------------------------------------------------
# Kernels
# --------------------------------------------------------------------------
def _flatten_head_kernel(x_ref, w_ref, b_ref, o_ref):
    # x_ref: [TM, nf], w_ref: [nf, TW], b_ref: [1, TW] (f32), o_ref: [TM, TW]
    acc = jnp.dot(x_ref[...], w_ref[...], preferred_element_type=jnp.float32)
    o_ref[...] = (acc + b_ref[...]).astype(o_ref.dtype)


def _make_ktiled_kernel(nf, tk):
    """Matmul with the nf (K) axis tiled across grid axis 1 (reduction, last)."""
    ragged = (nf % tk) != 0

    def kernel(x_ref, w_ref, b_ref, o_ref, acc_ref):
        k = pl.program_id(1)

        @pl.when(k == 0)
        def _init():
            acc_ref[...] = jnp.zeros_like(acc_ref)

        x = x_ref[...]
        w = w_ref[...]
        if ragged:
            # The last K block reads past nf; that padding is undefined (stale
            # VMEM, possibly NaN/Inf), so zero BOTH operands beyond the valid
            # range before they hit the MXU.
            valid = nf - k * tk  # >= tk for every block except the last one
            col = jax.lax.broadcasted_iota(jnp.int32, x.shape, 1)
            row = jax.lax.broadcasted_iota(jnp.int32, w.shape, 0)
            x = jnp.where(col < valid, x, jnp.zeros_like(x))
            w = jnp.where(row < valid, w, jnp.zeros_like(w))

        acc_ref[...] += jnp.dot(x, w, preferred_element_type=jnp.float32)

        @pl.when(k == pl.num_programs(1) - 1)
        def _finish():
            o_ref[...] = (acc_ref[...] + b_ref[...]).astype(o_ref.dtype)

    return kernel


# --------------------------------------------------------------------------
# Parameter prep (one-time, at init — NOT every forward)
# --------------------------------------------------------------------------
def prepare_flatten_head_params(weight, bias, compute_dtype=None):
    """weight: [target_window, nf] (torch nn.Linear layout); bias: [target_window].

    Returns (w_kn [nf, target_window], b_row [1, target_window] float32).
    Optionally casts the weight to `compute_dtype` (e.g. bf16) — for this
    HBM-bound op that roughly halves weight traffic; accumulation stays f32.
    """
    tw, nf = weight.shape
    w_kn = jnp.asarray(weight).T
    if compute_dtype is not None:
        w_kn = w_kn.astype(compute_dtype)
    b_row = jnp.asarray(bias).astype(jnp.float32).reshape(1, tw)
    return w_kn, b_row


# --------------------------------------------------------------------------
# Tiling / VMEM budgeting
# --------------------------------------------------------------------------
def _vmem_budget_bytes():
    """Generation-aware (tile-pick budget, hard vmem_limit cap) in bytes."""
    cap = 0
    try:
        cap = int(getattr(pltpu.get_tpu_info(), "vmem_capacity_bytes", 0))
    except Exception:
        cap = 0
    if cap <= 0:
        cap = 64 * 1024 * 1024  # unknown: assume the smallest (v7x-class) VMEM
    if cap >= 96 * 1024 * 1024:  # v5e / v6e class (128 MiB physical)
        return 80 * 1024 * 1024, 100 * 1024 * 1024
    # v7x class (64 MiB physical per TC) or smaller: leave internal headroom.
    budget = max(min(40 * 1024 * 1024, (cap * 5) // 8), 8 * 1024 * 1024)
    limit = max(min(48 * 1024 * 1024, (cap * 3) // 4), budget)
    return budget, limit


def _vmem_need(tm, tk, tw, k_tiled, x_isz, w_isz, o_isz):
    """VMEM footprint estimate, rounded up to the physical (8,128) tiling."""
    tm_p = _round_up(tm, _SUBLANE)
    tk_lane = _round_up(tk, _LANE)
    tk_sub = _round_up(tk, _SUBLANE)
    tw_p = _round_up(tw, _LANE)
    need = 2 * tm_p * tk_lane * x_isz          # x blocks (double-buffered)
    need += 2 * tk_sub * tw_p * w_isz          # weight blocks
    need += 2 * _SUBLANE * tw_p * 4            # bias row (f32)
    need += 2 * tm_p * tw_p * o_isz            # output blocks
    if k_tiled:
        need += tm_p * tw_p * 4                # f32 accumulator scratch
    return need


def _pick_tiles(m, nf, tw, x_isz, w_isz, o_isz, budget, force_tk=None):
    """Returns (tm, tk). tk == nf means the single-dot (un-K-tiled) path."""
    tm_candidates = ([m] if m <= 512 else []) + [t for t in (512, 256) if t < m]
    if not tm_candidates:
        tm_candidates = [m]

    if force_tk is None:
        for tm in tm_candidates:
            if _vmem_need(tm, nf, tw, False, x_isz, w_isz, o_isz) <= budget:
                return tm, nf

    # K-tiled fallback (large nf, or forced for testing). tk must be a
    # multiple of 128; ragged last K block is masked in-kernel.
    if force_tk is not None:
        tk_candidates = [int(force_tk)]
    else:
        tk_candidates = [t for t in (2048, 1024, 512, 256, 128) if t < nf]
        if not tk_candidates:
            tk_candidates = [128]
    tm_candidates2 = list(tm_candidates)
    if 128 < m and 128 not in tm_candidates2:
        tm_candidates2.append(128)
    for tm in tm_candidates2:
        for tk in tk_candidates:
            if _vmem_need(tm, tk, tw, True, x_isz, w_isz, o_isz) <= budget:
                return tm, tk
    # Absolute fallback: smallest legal tiles (fits any realistic budget).
    return min(m, 128), tk_candidates[-1]


# --------------------------------------------------------------------------
# Forward
# --------------------------------------------------------------------------
def flatten_head(x, w_kn, b_row, target_window, *, compute_dtype=None, k_tile=None):
    """FlattenHead forward.

    x:     [B, n_vars, d_model, patch_num]
    w_kn:  [nf, target_window]     (from prepare_flatten_head_params)
    b_row: [1, target_window] f32  (from prepare_flatten_head_params)
    Returns [B, n_vars, target_window] in x's dtype.
    """
    B, n_vars, d_model, patch_num = x.shape
    nf = d_model * patch_num
    assert w_kn.shape == (nf, target_window), (w_kn.shape, nf, target_window)
    assert b_row.shape == (1, target_window)

    out_dtype = x.dtype
    M = B * n_vars
    x2d = x.reshape(M, nf)
    if compute_dtype is not None and x2d.dtype != jnp.dtype(compute_dtype):
        x2d = x2d.astype(compute_dtype)

    x_isz = jnp.dtype(x2d.dtype).itemsize
    w_isz = jnp.dtype(w_kn.dtype).itemsize
    o_isz = jnp.dtype(out_dtype).itemsize

    budget, hard_cap = _vmem_budget_bytes()
    tm, tk = _pick_tiles(M, nf, target_window, x_isz, w_isz, o_isz, budget,
                         force_tk=k_tile)

    # v7x has 2 TensorCores; make sure the "parallel" axis exposes >= 2
    # programs when the split is legal (halved tile stays a sublane multiple).
    if pl.cdiv(M, tm) == 1 and tm >= 16 and tm % 16 == 0:
        tm //= 2

    gm = pl.cdiv(M, tm)
    k_tiled = tk < nf
    gk = pl.cdiv(nf, tk) if k_tiled else 1

    need = _vmem_need(tm, tk, target_window, k_tiled, x_isz, w_isz, o_isz)
    vmem_limit = int(max(min(hard_cap, max(32 * 1024 * 1024, need + need // 2)),
                         need))  # never declare less than we actually use

    cost = pl.CostEstimate(
        flops=2 * M * nf * target_window,
        transcendentals=0,
        bytes_accessed=(M * nf * x_isz + nf * target_window * w_isz
                        + 4 * target_window + M * target_window * o_isz),
    )

    if not k_tiled:
        out2d = pl.pallas_call(
            _flatten_head_kernel,
            out_shape=jax.ShapeDtypeStruct((M, target_window), out_dtype),
            grid=(gm,),
            in_specs=[
                pl.BlockSpec((tm, nf), lambda i: (i, 0)),              # x tile
                pl.BlockSpec((nf, target_window), lambda i: (0, 0)),   # weight (fetched once)
                pl.BlockSpec((1, target_window), lambda i: (0, 0)),    # bias row (f32)
            ],
            out_specs=pl.BlockSpec((tm, target_window), lambda i: (i, 0)),
            compiler_params=pltpu.CompilerParams(
                dimension_semantics=("parallel",),
                vmem_limit_bytes=vmem_limit,
            ),
            cost_estimate=cost,
        )(x2d, w_kn, b_row)
    else:
        kernel = _make_ktiled_kernel(nf, tk)
        out2d = pl.pallas_call(
            kernel,
            out_shape=jax.ShapeDtypeStruct((M, target_window), out_dtype),
            grid=(gm, gk),  # reduction (K) axis last, "arbitrary"
            in_specs=[
                pl.BlockSpec((tm, tk), lambda i, k: (i, k)),               # x tile
                pl.BlockSpec((tk, target_window), lambda i, k: (k, 0)),    # weight K-slab
                pl.BlockSpec((1, target_window), lambda i, k: (0, 0)),     # bias row (f32)
            ],
            out_specs=pl.BlockSpec((tm, target_window), lambda i, k: (i, 0)),
            scratch_shapes=[pltpu.VMEM((tm, target_window), jnp.float32)],
            compiler_params=pltpu.CompilerParams(
                dimension_semantics=("parallel", "arbitrary"),
                vmem_limit_bytes=vmem_limit,
            ),
            cost_estimate=cost,
        )(x2d, w_kn, b_row)

    return out2d.reshape(B, n_vars, target_window)


# --------------------------------------------------------------------------
# Self-test
# --------------------------------------------------------------------------
if __name__ == "__main__":
    def torch_like_ref(x, weight, bias):
        B, n_vars, d_model, patch_num = x.shape
        return x.reshape(B, n_vars, d_model * patch_num) @ weight.T + bias

    key = jax.random.PRNGKey(0)

    # --- Test 1: default fast path (single dot, no K tiling) ------------------
    B, n_vars, d_model, patch_num, tw = 2, 4, 16, 8, 32   # nf = 128
    k1, k2, k3, key = jax.random.split(key, 4)
    x = jax.random.normal(k1, (B, n_vars, d_model, patch_num), dtype=jnp.float32)
    weight = jax.random.normal(k2, (tw, d_model * patch_num), dtype=jnp.float32) * 0.02
    bias = jax.random.normal(k3, (tw,), dtype=jnp.float32) * 0.02

    w_kn, b_row = prepare_flatten_head_params(weight, bias)
    out = jax.block_until_ready(flatten_head(x, w_kn, b_row, tw))
    ref = torch_like_ref(x, weight, bias)
    assert out.shape == (B, n_vars, tw)
    assert jnp.allclose(out, ref, atol=1e-4, rtol=1e-4), "fast path mismatch"

    # --- Test 2: forced K-tiled path with a ragged last K block ---------------
    d_model2, patch_num2 = 24, 10                         # nf = 240 (not /128)
    k1, k2, k3, key = jax.random.split(key, 4)
    x2 = jax.random.normal(k1, (B, n_vars, d_model2, patch_num2), dtype=jnp.float32)
    weight2 = jax.random.normal(k2, (tw, d_model2 * patch_num2), dtype=jnp.float32) * 0.02
    bias2 = jax.random.normal(k3, (tw,), dtype=jnp.float32) * 0.02

    w_kn2, b_row2 = prepare_flatten_head_params(weight2, bias2)
    out2 = jax.block_until_ready(flatten_head(x2, w_kn2, b_row2, tw, k_tile=128))
    ref2 = torch_like_ref(x2, weight2, bias2)
    assert out2.shape == (B, n_vars, tw)
    assert jnp.allclose(out2, ref2, atol=1e-4, rtol=1e-4), "K-tiled path mismatch"

    # --- Test 3: optional bf16 operands (HBM-traffic halving), f32 accumulation
    w_kn3, b_row3 = prepare_flatten_head_params(weight, bias, compute_dtype=jnp.bfloat16)
    out3 = jax.block_until_ready(
        flatten_head(x, w_kn3, b_row3, tw, compute_dtype=jnp.bfloat16))
    assert out3.shape == (B, n_vars, tw)
    assert jnp.allclose(out3, ref, atol=2e-2, rtol=2e-2), "bf16 path mismatch"

    print("KERNEL_OK")
</pallas_src>

<mosaic_0001>
module attributes {stable_mosaic.version = 11 : i64} {
  func.func @_flatten_head_kernel(%arg0: i32, %arg1: memref<8x128xf32, #tpu.memory_space<vmem>>, %arg2: memref<128x32xf32, #tpu.memory_space<vmem>>, %arg3: memref<1x32xf32, #tpu.memory_space<vmem>>, %arg4: memref<8x32xf32, #tpu.memory_space<vmem>>) attributes {dimension_semantics = [#tpu.dimension_semantics<parallel>], iteration_bounds = array<i64: 1>, scalar_prefetch = 0 : i64, scratch_operands = 0 : i64, tpu.core_type = #tpu.core_type<tc>, window_params = [{transform_indices = @transform_0, window_bounds = array<i64: 8, 128>}, {pipeline_mode = #tpu.pipeline_mode<synchronous>, transform_indices = @transform_1, window_bounds = array<i64: 128, 32>}, {pipeline_mode = #tpu.pipeline_mode<synchronous>, transform_indices = @transform_2, window_bounds = array<i64: 1, 32>}, {transform_indices = @transform_3, window_bounds = array<i64: 8, 32>}]} {
    %c0 = arith.constant 0 : index
    %c0_0 = arith.constant 0 : index
    %0 = vector.load %arg1[%c0, %c0_0] : memref<8x128xf32, #tpu.memory_space<vmem>>, vector<8x128xf32>
    %c0_1 = arith.constant 0 : index
    %c0_2 = arith.constant 0 : index
    %1 = vector.load %arg2[%c0_1, %c0_2] : memref<128x32xf32, #tpu.memory_space<vmem>>, vector<128x32xf32>
    %cst = arith.constant dense<0.000000e+00> : vector<8x32xf32>
    %2 = tpu.matmul %0, %1, %cst {dimension_numbers = #tpu.dot_dimension_numbers<[1], [0], [0], [1], [0, 0, 1, 1], [], []>} : vector<8x128xf32>, vector<128x32xf32>, vector<8x32xf32> -> vector<8x32xf32>
    %c0_3 = arith.constant 0 : index
    %c0_4 = arith.constant 0 : index
    %3 = vector.load %arg3[%c0_3, %c0_4] : memref<1x32xf32, #tpu.memory_space<vmem>>, vector<1x32xf32>
    %4 = vector.broadcast %3 : vector<1x32xf32> to vector<8x32xf32>
    %5 = arith.addf %2, %4 : vector<8x32xf32>
    %c0_5 = arith.constant 0 : index
    %c0_6 = arith.constant 0 : index
    %6 = vector.load %arg4[%c0_5, %c0_6] : memref<8x32xf32, #tpu.memory_space<vmem>>, vector<8x32xf32>
    tpu.vector_store %arg4[%c0_5, %c0_6], %5 {strides = array<i32>} : memref<8x32xf32, #tpu.memory_space<vmem>>, vector<8x32xf32>,
    return
  }
  func.func @transform_0(%arg0: i32) -> (i32, i32) {
    %c0_i32 = arith.constant 0 : i32
    %c0_i32_0 = arith.constant 0 : i32
    return %arg0, %c0_i32 : i32, i32
  }
  func.func @transform_1(%arg0: i32) -> (i32, i32) {
    %c0_i32 = arith.constant 0 : i32
    %c0_i32_0 = arith.constant 0 : i32
    %c0_i32_1 = arith.constant 0 : i32
    return %c0_i32, %c0_i32_0 : i32, i32
  }
  func.func @transform_2(%arg0: i32) -> (i32, i32) {
    %c0_i32 = arith.constant 0 : i32
    %c0_i32_0 = arith.constant 0 : i32
    %c0_i32_1 = arith.constant 0 : i32
    return %c0_i32, %c0_i32_0 : i32, i32
  }
  func.func @transform_3(%arg0: i32) -> (i32, i32) {
    %c0_i32 = arith.constant 0 : i32
    %c0_i32_0 = arith.constant 0 : i32
    return %arg0, %c0_i32 : i32, i32
  }
}

</mosaic_0001>

<llo_original>
// kernel: tpu_custom_call.1
$region0: #{tpu_custom_call.1}
  #allocation0 [shape = 'u32[]', space=smem, size = 0x4, offset = 0x4, fixed_abs, tag = 'smem constant byte address 0x4 - core index']
  #allocation1 [shape = 'u32[144,128]{1,0:T(1,128)}', space=vmem, size = 0x12000, scoped, tag = 'internal scratch']
  %s0 = inlined_call_operand.vmem [shape: f32[8,128], index: 0, kind: input, shape index: {}]
  %s1 = inlined_call_operand.vmem [shape: f32[128,32], index: 1, kind: input, shape index: {}]
  %s2 = inlined_call_operand.vmem [shape: f32[1,32], index: 2, kind: input, shape index: {}]
  %s3 = inlined_call_operand.hbm [shape: f32[8,32], index: 3, kind: output, shape index: {}]
  %s4 = sld [smem:[#allocation0]]
  $region22: #{tpu_custom_call.1} parent=0
    _
  %s6 = ssub.s32 1, %s4
  %s7 = scalar_select 0, %s6, %s4
  $region1: #{tpu_custom_call.1} parent=0
    #allocation2 [shape = 'u8[4096]{0}', space=vmem, size = 0x1000, scoped, tag = 'output window, operand 0, single buffered']
    #allocation3 [shape = 's32[1]{0}', space=sflag, size = 0x4, scoped, tag = 'scoped memory for tpu_custom_call.1']
    %8 = vsyncpa [#allocation3], 0
    // Predicated region
    $region2: #{tpu_custom_call.1} parent=1 // pred_check
      _
    $region3: #{tpu_custom_call.1} parent=1 // pred_check_branch
      %10 = sbr.rel (0) target = $region5
    $region4: #{tpu_custom_call.1} parent=1 // pred_region
      _
    $region5: #{tpu_custom_call.1} parent=1 // pred_fallthru
      _
    // Predicated region
    $region6: #{tpu_custom_call.1} parent=1 // pred_check
      _
    $region7: #{tpu_custom_call.1} parent=1 // pred_check_branch
      %12 = sbr.rel (0) target = $region9
    $region8: #{tpu_custom_call.1} parent=1 // pred_region
      _
    $region9: #{tpu_custom_call.1} parent=1 // pred_fallthru
      _
    // Predicated region
    $region10: #{tpu_custom_call.1} parent=1 // pred_check
      _
    $region11: #{tpu_custom_call.1} parent=1 // pred_check_branch
      %14 = sbr.rel (0) target = $region13
    $region12: #{tpu_custom_call.1} parent=1 // pred_region
      _
    $region13: #{tpu_custom_call.1} parent=1 // pred_fallthru
      _
    %v15 = vld [vmem:[%s0] sm:$0xff]
    %v16 = vld [vmem:[%s1] sm:$0xff]
    %v17 = vld [vmem:[%s1 + $0x8] sm:$0xff]
    %v18 = vld [vmem:[%s1 + $0x10] sm:$0xff]
    %v19 = vld [vmem:[%s1 + $0x18] sm:$0xff]
    %v20 = vld [vmem:[%s1 + $0x20] sm:$0xff]
    %v21 = vld [vmem:[%s1 + $0x28] sm:$0xff]
    %v22 = vld [vmem:[%s1 + $0x30] sm:$0xff]
    %v23 = vld [vmem:[%s1 + $0x38] sm:$0xff]
    %v24 = vld [vmem:[%s1 + $0x40] sm:$0xff]
    %v25 = vld [vmem:[%s1 + $0x48] sm:$0xff]
    %v26 = vld [vmem:[%s1 + $0x50] sm:$0xff]
    %v27 = vld [vmem:[%s1 + $0x58] sm:$0xff]
    %v28 = vld [vmem:[%s1 + $0x60] sm:$0xff]
    %v29 = vld [vmem:[%s1 + $0x68] sm:$0xff]
    %v30 = vld [vmem:[%s1 + $0x70] sm:$0xff]
    %v31 = vld [vmem:[%s1 + $0x78] sm:$0xff]
    %v32 = vld [vmem:[%s2] sm:$0x1]
    %v34 = vlaneseq
    %v35 = vshrl.u32 %v34, 7
    %v36 = vsub.s32 0, %v35
    %v37 = vrot.slane %v32, %v36
    %39 = vmatprep.subr.mxu0 0.0
    %40 = vmatpush1.msra.mxu0 %v16
    %41 = vmatprep.subr.mxu0 0.0
    %42 = vmatpush1.msra.mxu0 %v17
    %43 = vmatprep.subr.mxu0 0.0
    %44 = vmatpush1.msra.mxu0 %v18
    %45 = vmatprep.subr.mxu0 0.0
    %46 = vmatpush1.msra.mxu0 %v19
    %47 = vmatprep.subr.mxu0 0.0
    %48 = vmatpush1.msra.mxu0 %v20
    %49 = vmatprep.subr.mxu0 0.0
    %50 = vmatpush1.msra.mxu0 %v21
    %51 = vmatprep.subr.mxu0 0.0
    %52 = vmatpush1.msra.mxu0 %v22
    %53 = vmatprep.subr.mxu0 0.0
    %54 = vmatpush1.msra.mxu0 %v23
    %55 = vmatprep.subr.mxu0 0.0
    %56 = vmatpush1.msra.mxu0 %v24
    %57 = vmatprep.subr.mxu0 0.0
    %58 = vmatpush1.msra.mxu0 %v25
    %59 = vmatprep.subr.mxu0 0.0
    %60 = vmatpush1.msra.mxu0 %v26
    %61 = vmatprep.subr.mxu0 0.0
    %62 = vmatpush1.msra.mxu0 %v27
    %63 = vmatprep.subr.mxu0 0.0
    %64 = vmatpush1.msra.mxu0 %v28
    %65 = vmatprep.subr.mxu0 0.0
    %66 = vmatpush1.msra.mxu0 %v29
    %67 = vmatprep.subr.mxu0 0.0
    %68 = vmatpush1.msra.mxu0 %v30
    %69 = vmatprep.subr.mxu0 0.0
    %70 = vmatpush1.msra.mxu0 %v31
    %71 = vmatprep.subr.mxu0 0.0
    %72 = vmatpush1.msra.mxu0 0.0
    %73 = vmatprep.subr.mxu0 0.0
    %74 = vmatpush1.msra.mxu0 0.0
    %75 = vmatprep.subr.mxu0 0.0
    %76 = vmatpush1.msra.mxu0 0.0
    %77 = vmatprep.subr.mxu0 0.0
    %78 = vmatpush1.msra.mxu0 0.0
    %79 = vmatprep.subr.mxu0 0.0
    %80 = vmatpush1.msra.mxu0 0.0
    %81 = vmatprep.subr.mxu0 0.0
    %82 = vmatpush1.msra.mxu0 0.0
    %83 = vmatprep.subr.mxu0 0.0
    %84 = vmatpush1.msra.mxu0 0.0
    %85 = vmatprep.subr.mxu0 0.0
    %86 = vmatpush1.msra.mxu0 0.0
    %87 = vmatprep.subr.mxu0 0.0
    %88 = vmatpush1.msra.mxu0 0.0
    %89 = vmatprep.subr.mxu0 0.0
    %90 = vmatpush1.msra.mxu0 0.0
    %91 = vmatprep.subr.mxu0 0.0
    %92 = vmatpush1.msra.mxu0 0.0
    %93 = vmatprep.subr.mxu0 0.0
    %94 = vmatpush1.msra.mxu0 0.0
    %95 = vmatprep.subr.mxu0 0.0
    %96 = vmatpush1.msra.mxu0 0.0
    %97 = vmatprep.subr.mxu0 0.0
    %98 = vmatpush1.msra.mxu0 0.0
    %99 = vmatprep.subr.mxu0 0.0
    %100 = vmatpush1.msra.mxu0 0.0
    %101 = vmatprep.subr.mxu0 0.0
    %102 = vmatpush1.msra.mxu0 0.0
    %103 = vmatprep.mubr.f32.mxu0 0.0
    %104 = vmatmul.mubr.f32.gmra.mrb[0].mxu0 %v15
    %v105 = vpop.f32.mrb[0].mxu0
    %v106 = vadd.f32 %v37, %v105
    %v107 = vpop.f32.mrb[0].mxu0
    %108 = vdwg.mxu0
    %vm109 = vcmask 261120
    %110 = vst.msk [vmem:[#allocation2] sm:$0xff] %vm109, %v106
    // Predicated region
    $region14: #{tpu_custom_call.1} parent=1 // pred_check
      _
    $region15: #{tpu_custom_call.1} parent=1 // pred_check_branch
      %112 = sbr.rel (0) target = $region17
    $region16: #{tpu_custom_call.1} parent=1 // pred_region
      %s114 = ssub.s32 128, 128
      %115 = vsyncadd [#allocation3], %s114
      %s117 = sshll.u32 [#allocation2], 4
      %s118 = int_to_ptr.vmem [resolvable:$true] %s117
      %120 = dma.vmem_to_hbm [thread:$0]  %s118, 128, %s3, [#allocation3]
    $region17: #{tpu_custom_call.1} parent=1 // pred_fallthru
      _
    // Predicated region
    $region18: #{tpu_custom_call.1} parent=1 // pred_check
      _
    $region19: #{tpu_custom_call.1} parent=1 // pred_check_branch
      %122 = sbr.rel (0) target = $region21
    $region20: #{tpu_custom_call.1} parent=1 // pred_region
      %123 = dma.done [#allocation3], 128
    $region21: #{tpu_custom_call.1} parent=1 // pred_fallthru
      _
    %124 = vsyncpa [#allocation3], 1

</llo_original>
